<compile_context>
chip_gen: v7x
topology: tpu7x:2x2x1
jax: 0.10.0
libtpu: 0.0.40
codegen_flags: <defaults>
</compile_context>

<pallas_src>
import functools

import jax
import jax.numpy as jnp
from jax import lax
from jax.experimental import pallas as pl
from jax.experimental.pallas import tpu as pltpu


# --------------------------------------------------------------------------
# Parameter plumbing (plain JAX glue): grouped torch-style weights -> dense.
# --------------------------------------------------------------------------
def grouped_weight_to_dense(w_oihw, groups):
    """torch grouped conv weight (Cout, Cin//groups, KH, KW) -> dense
    block-diagonal weight (KH, KW, Cin, Cout) in torch output-channel order."""
    Cout, Cin_g, KH, KW = w_oihw.shape
    Cin = Cin_g * groups
    cout_g = Cout // groups
    dense = jnp.zeros((KH, KW, Cin, Cout), w_oihw.dtype)
    for g in range(groups):
        blk = jnp.transpose(w_oihw[g * cout_g:(g + 1) * cout_g], (2, 3, 1, 0))
        dense = dense.at[:, :, g * Cin_g:(g + 1) * Cin_g,
                         g * cout_g:(g + 1) * cout_g].set(blk)
    return dense


def rsoftmax_output_perm(channels, radix, cardinality):
    """fc2 output channels: torch [cardinality, radix, ch_per_card] order ->
    kernel [radix, cardinality, ch_per_card] order, so logits chunk r lines up
    with conv radix split r."""
    cpc = channels // cardinality
    perm = []
    for r in range(radix):
        for g in range(cardinality):
            for cc in range(cpc):
                perm.append(g * radix * cpc + r * cpc + cc)
    return jnp.asarray(perm, dtype=jnp.int32)


def prepare_splat_params(w_conv, b_conv, w_fc1, b_fc1, w_fc2, b_fc2,
                         *, channels, radix, cardinality):
    groups_total = cardinality * radix
    perm = rsoftmax_output_perm(channels, radix, cardinality)
    return {
        # raw torch-layout params (used by the pure-JAX reference)
        "w_conv_oihw": w_conv, "b_conv": b_conv,
        "w_fc1_oihw": w_fc1, "b_fc1": b_fc1,
        "w_fc2_oihw": w_fc2, "b_fc2": b_fc2,
        # kernel-ready params
        "w_conv_dense": grouped_weight_to_dense(w_conv, groups_total),
        "w_fc1_bf16":
            grouped_weight_to_dense(w_fc1, cardinality)[0, 0].astype(jnp.bfloat16),
        "w_fc2_bf16_perm":
            grouped_weight_to_dense(w_fc2, cardinality)[0, 0][:, perm]
            .astype(jnp.bfloat16),
        "b_fc2_perm": b_fc2[perm],
    }


def _build_band_conv_weight(w_dense, *, radix, channels, W, Wout, pad):
    """Fold the W axis into the matmul: banded block-Toeplitz weight
    (KH, W*Cin, radix*Wout*channels).  Out-of-range (zero-padded) taps are
    simply absent from the band, so the scratch needs no left/right padding."""
    KH, KW, Cin, _ = w_dense.shape
    Wch = Wout * channels
    w_r = w_dense.reshape(KH, KW, Cin, radix, channels)
    band = jnp.zeros((KH, W * Cin, radix * Wch), jnp.float32)
    for wo in range(Wout):
        for kw in range(KW):
            w_in = wo + kw - pad
            if not 0 <= w_in < W:
                continue
            for r in range(radix):
                band = band.at[:, w_in * Cin:(w_in + 1) * Cin,
                               r * Wch + wo * channels:
                               r * Wch + (wo + 1) * channels].set(
                                   w_r[:, kw, :, r, :])
    return band.astype(jnp.bfloat16)


def _build_tiled_conv_bias(b_conv, *, radix, channels, Wout):
    b = jnp.broadcast_to(b_conv.astype(jnp.float32).reshape(radix, 1, channels),
                         (radix, Wout, channels))
    return b.reshape(1, radix * Wout * channels)


# --------------------------------------------------------------------------
# VMEM footprint / block-batch heuristics (generation aware).
# --------------------------------------------------------------------------
def _per_step_vmem_bytes(NB, *, H, W, pad, Hout, Wout, Cin, channels, KH, radix,
                         inter, x_bytes, out_bytes):
    Hp = H + 2 * pad
    Wci, Wch = W * Cin, Wout * channels
    Ncols = radix * Wch
    Mrows = NB * Hout
    fp = 0
    fp += 2 * NB * H * Wci * x_bytes            # input block (double buffered)
    fp += 2 * NB * Hout * Wch * out_bytes       # output block (double buffered)
    fp += NB * Hp * Wci * 2                     # bf16 row-padded scratch
    fp += 2 * Mrows * Wci * 2                   # live bf16 conv-tap windows
    fp += 2 * Mrows * Ncols * 4                 # conv accumulator + x_act (f32)
    fp += 2 * Mrows * Wch * 4                   # radix-sum / weighted-term temps
    fp += KH * Wci * Ncols * 2 + Ncols * 4      # band weight (bf16) + tiled bias
    fp += channels * inter * 2 + inter * 4      # fc1 weight/bias
    fp += inter * radix * channels * 2 + radix * channels * 4   # fc2 weight/bias
    return fp


def _vmem_budget_and_targets():
    """Returns (vmem_capacity, per-step budget, target matmul rows, min steps)."""
    try:
        cap = int(pltpu.get_tpu_info().vmem_capacity_bytes)
    except Exception:            # interpret mode / unknown target
        cap = 64 * 1024 * 1024
    if cap >= 100 * 1024 * 1024:
        # v5e / v6e: 128 MiB physical VMEM, one TensorCore per chip.
        return cap, 48 * 1024 * 1024, 512, 2
    # v7x-like: 64 MiB VMEM, 2 TensorCores -> keep >= 4 grid steps so each
    # core gets >= 2 steps and the input/output pipelining can overlap.
    return cap, 24 * 1024 * 1024, 256, 4


def _choose_block_batch(N, Hout, footprint, budget, target_m, min_steps):
    divisors = [d for d in range(1, N + 1) if N % d == 0]
    fits = [d for d in divisors if footprint(d) <= budget] or [1]
    nb = max(fits)
    capped = [d for d in fits if d * Hout <= max(target_m, Hout)]
    if capped:
        nb = max(capped)
    while N // nb < min_steps:
        smaller = [d for d in fits if d < nb]
        if not smaller:
            break
        nb = max(smaller)
    return nb


# --------------------------------------------------------------------------
# Pallas kernel: one grid step == NB batch elements.
# --------------------------------------------------------------------------
def _make_kernel(NB, H, pad, Hout, Wout, Wci, channels, KH, radix):
    Wch = Wout * channels
    Mrows = NB * Hout

    def kernel(x_ref, wc_ref, bc_ref, w1_ref, b1_ref, w2_ref, b2_ref,
               out_ref, xp_ref):
        # ---- row-padded bf16 input copy: zero only the halo rows ----
        if pad:
            zero_rows = jnp.zeros((NB, pad, Wci), xp_ref.dtype)
            xp_ref[:, :pad, :] = zero_rows
            xp_ref[:, pad + H:, :] = zero_rows
        xp_ref[:, pad:pad + H, :] = x_ref[...].astype(xp_ref.dtype)

        # ---- conv: KH accumulated banded matmuls, columns = [r, wo, c] ----
        acc = jnp.zeros((Mrows, radix * Wch), jnp.float32)
        for kh in range(KH):
            tap = xp_ref[:, kh:kh + Hout, :].reshape(Mrows, Wci)  # bf16 view
            acc = acc + jnp.dot(tap, wc_ref[kh],
                                preferred_element_type=jnp.float32)
        x_act = jnp.maximum(acc + bc_ref[...], 0.0)   # (Mrows, radix*Wout*ch)

        # ---- radix split (contiguous lane slabs) + global average pool ----
        splits = [x_act[:, r * Wch:(r + 1) * Wch] for r in range(radix)]
        gsum = splits[0]
        for r in range(1, radix):
            gsum = gsum + splits[r]
        pooled = jnp.mean(gsum.reshape(NB, Hout, Wch), axis=1)    # (NB, Wout*ch)
        gap = pooled[:, 0:channels]
        for wo in range(1, Wout):
            gap = gap + pooled[:, wo * channels:(wo + 1) * channels]
        gap = gap * (1.0 / Wout)                                  # (NB, channels)

        # ---- fc1 -> ReLU -> fc2 (bf16 MXU inputs, f32 accumulation) ----
        h = jnp.dot(gap.astype(jnp.bfloat16), w1_ref[...],
                    preferred_element_type=jnp.float32) + b1_ref[...]
        h = jnp.maximum(h, 0.0)
        logits = jnp.dot(h.astype(jnp.bfloat16), w2_ref[...],
                         preferred_element_type=jnp.float32) + b2_ref[...]

        # ---- rSoftMax over radix (sigmoid when radix == 1) ----
        if radix > 1:
            rows = [logits[:, r * channels:(r + 1) * channels]
                    for r in range(radix)]
            m = rows[0]
            for r in range(1, radix):
                m = jnp.maximum(m, rows[r])
            exps = [jnp.exp(rr - m) for rr in rows]
            denom = exps[0]
            for r in range(1, radix):
                denom = denom + exps[r]
            inv = pl.reciprocal(denom)      # exact divide on a tiny (NB, ch) array
            attens = [e * inv for e in exps]
        else:
            attens = [1.0 / (1.0 + jnp.exp(-logits))]

        # ---- attention-weighted recombination, stored lane-dense ----
        out = None
        for r in range(radix):
            a_t = jnp.concatenate([attens[r]] * Wout, axis=-1)   # (NB, Wout*ch)
            term = splits[r].reshape(NB, Hout, Wch) * a_t[:, None, :]
            out = term if out is None else out + term
        out_ref[...] = out.astype(out_ref.dtype)

    return kernel


# --------------------------------------------------------------------------
# Wrapper
# --------------------------------------------------------------------------
def splat_conv2d_pallas(x_nchw, params, *, channels, radix, cardinality,
                        kernel_size, padding, stride=1, dilation=1):
    if stride != 1 or dilation != 1:
        raise NotImplementedError(
            "TODO(synk): stride>1 / dilation>1 not implemented in this kernel")
    N, Cin, H, W = x_nchw.shape
    KH = KW = kernel_size
    pad = padding
    Hout, Wout = H + 2 * pad - KH + 1, W + 2 * pad - KW + 1
    Cout = channels * radix
    inter = params["w_fc1_bf16"].shape[1]
    Hp = H + 2 * pad
    Wci, Wch = W * Cin, Wout * channels

    wc_band = _build_band_conv_weight(params["w_conv_dense"], radix=radix,
                                      channels=channels, W=W, Wout=Wout, pad=pad)
    bc_tiled = _build_tiled_conv_bias(params["b_conv"], radix=radix,
                                      channels=channels, Wout=Wout)

    cap, budget, target_m, min_steps = _vmem_budget_and_targets()
    footprint = functools.partial(
        _per_step_vmem_bytes, H=H, W=W, pad=pad, Hout=Hout, Wout=Wout, Cin=Cin,
        channels=channels, KH=KH, radix=radix, inter=inter,
        x_bytes=x_nchw.dtype.itemsize, out_bytes=x_nchw.dtype.itemsize)
    NB = _choose_block_batch(N, Hout, footprint, budget, target_m, min_steps)
    vmem_limit = int(min(max(int(footprint(NB) * 1.4), 16 * 1024 * 1024),
                         int(cap * 0.9)))
    grid = (N // NB,)

    # NCHW -> lane-dense (N, H, W*Cin) at the module boundary.
    x_flat = jnp.transpose(x_nchw, (0, 2, 3, 1)).reshape(N, H, Wci)

    kernel = _make_kernel(NB, H, pad, Hout, Wout, Wci, channels, KH, radix)
    const1 = dict(pipeline_mode=pl.Buffered(1))   # weights/biases: single buffer

    # NOTE: out last dim Wout*channels is a multiple of 128 at the demo and
    # ResNeSt production shapes; TODO(synk): pad channels / split the store if
    # that ever stops holding (keeps full-vector stores instead of vst.msk).
    out_flat = pl.pallas_call(
        kernel,
        out_shape=jax.ShapeDtypeStruct((N, Hout, Wch), x_nchw.dtype),
        grid_spec=pltpu.PrefetchScalarGridSpec(
            num_scalar_prefetch=0,
            grid=grid,
            in_specs=[
                pl.BlockSpec((NB, H, Wci), lambda i: (i, 0, 0)),
                pl.BlockSpec((KH, Wci, radix * Wch), lambda i: (0, 0, 0), **const1),
                pl.BlockSpec((1, radix * Wch), lambda i: (0, 0), **const1),
                pl.BlockSpec((channels, inter), lambda i: (0, 0), **const1),
                pl.BlockSpec((1, inter), lambda i: (0, 0), **const1),
                pl.BlockSpec((inter, Cout), lambda i: (0, 0), **const1),
                pl.BlockSpec((1, Cout), lambda i: (0, 0), **const1),
            ],
            out_specs=pl.BlockSpec((NB, Hout, Wch), lambda i: (i, 0, 0)),
            scratch_shapes=[pltpu.VMEM((NB, Hp, Wci), jnp.bfloat16)],
        ),
        compiler_params=pltpu.CompilerParams(
            dimension_semantics=("parallel",),
            vmem_limit_bytes=vmem_limit),
    )(
        x_flat,
        wc_band,
        bc_tiled,
        params["w_fc1_bf16"],
        params["b_fc1"].reshape(1, inter).astype(jnp.float32),
        params["w_fc2_bf16_perm"],
        params["b_fc2_perm"].reshape(1, Cout).astype(jnp.float32),
    )
    out_nhwc = out_flat.reshape(N, Hout, Wout, channels)
    return jnp.transpose(out_nhwc, (0, 3, 1, 2))             # back to NCHW


# --------------------------------------------------------------------------
# Pure-JAX reference (mirrors the PyTorch forward exactly, NCHW)
# --------------------------------------------------------------------------
def splat_conv2d_reference(x, params, *, channels, radix, cardinality, padding):
    conv = functools.partial(
        lax.conv_general_dilated,
        window_strides=(1, 1),
        dimension_numbers=("NCHW", "OIHW", "NCHW"),
    )
    y = conv(x, params["w_conv_oihw"],
             padding=[(padding, padding), (padding, padding)],
             feature_group_count=cardinality * radix)
    y = y + params["b_conv"][None, :, None, None]
    y = jnp.maximum(y, 0.0)

    if radix > 1:
        splited = [y[:, r * channels:(r + 1) * channels] for r in range(radix)]
        gap = sum(splited)
    else:
        gap = y
    gap = gap.mean(axis=(2, 3), keepdims=True)

    h = conv(gap, params["w_fc1_oihw"], padding=[(0, 0), (0, 0)],
             feature_group_count=cardinality)
    h = jnp.maximum(h + params["b_fc1"][None, :, None, None], 0.0)
    att = conv(h, params["w_fc2_oihw"], padding=[(0, 0), (0, 0)],
               feature_group_count=cardinality)
    att = att + params["b_fc2"][None, :, None, None]

    N = x.shape[0]
    att = att.reshape(N, -1)
    if radix > 1:
        a = att.reshape(N, cardinality, radix, -1).transpose(0, 2, 1, 3)
        a = jax.nn.softmax(a, axis=1)
        a = a.reshape(N, -1)[:, :, None, None]
        attens = [a[:, r * channels:(r + 1) * channels] for r in range(radix)]
        out = sum(at * sp for at, sp in zip(attens, splited))
    else:
        a = jax.nn.sigmoid(att)[:, :, None, None]
        out = a * y
    return out


# --------------------------------------------------------------------------
if __name__ == "__main__":
    # SplAtConv2d defaults: radix=2, groups(cardinality)=1, reduction_factor=4.
    N, in_channels, H, W = 4, 16, 8, 8
    channels = 16
    kernel_size, padding = 3, 1
    radix, cardinality, reduction_factor = 2, 1, 4
    groups_total = cardinality * radix
    inter_channels = max(in_channels * radix // reduction_factor, 32)   # = 32

    key = jax.random.PRNGKey(0)
    ks = jax.random.split(key, 7)
    x = jax.random.normal(ks[0], (N, in_channels, H, W), jnp.float32)

    # Deterministic synthetic parameters (PyTorch-layout grouped weights)
    w_conv = 0.1 * jax.random.normal(
        ks[1], (channels * radix, in_channels // groups_total,
                kernel_size, kernel_size), jnp.float32)
    b_conv = 0.1 * jax.random.normal(ks[2], (channels * radix,), jnp.float32)
    w_fc1 = 0.1 * jax.random.normal(
        ks[3], (inter_channels, channels // cardinality, 1, 1), jnp.float32)
    b_fc1 = 0.1 * jax.random.normal(ks[4], (inter_channels,), jnp.float32)
    w_fc2 = 0.1 * jax.random.normal(
        ks[5], (channels * radix, inter_channels // cardinality, 1, 1), jnp.float32)
    b_fc2 = 0.1 * jax.random.normal(ks[6], (channels * radix,), jnp.float32)

    params = prepare_splat_params(w_conv, b_conv, w_fc1, b_fc1, w_fc2, b_fc2,
                                  channels=channels, radix=radix,
                                  cardinality=cardinality)

    out = splat_conv2d_pallas(x, params, channels=channels, radix=radix,
                              cardinality=cardinality, kernel_size=kernel_size,
                              padding=padding)
    out = jax.block_until_ready(out)

    ref = splat_conv2d_reference(x, params, channels=channels, radix=radix,
                                 cardinality=cardinality, padding=padding)
    err = float(jnp.max(jnp.abs(out - ref)))
    # bf16 MXU inputs with f32 accumulation -> absolute error ~1e-2 at most here.
    if err > 5e-2:
        raise AssertionError(f"Pallas output mismatch vs reference: max|diff|={err}")
    print("KERNEL_OK")
</pallas_src>

<mosaic_0001>
module attributes {stable_mosaic.version = 11 : i64} {
  func.func @kernel(%arg0: i32, %arg1: memref<1x8x128xf32, #tpu.memory_space<vmem>>, %arg2: memref<3x128x256xbf16, #tpu.memory_space<vmem>>, %arg3: memref<1x256xf32, #tpu.memory_space<vmem>>, %arg4: memref<16x32xbf16, #tpu.memory_space<vmem>>, %arg5: memref<1x32xf32, #tpu.memory_space<vmem>>, %arg6: memref<32x32xbf16, #tpu.memory_space<vmem>>, %arg7: memref<1x32xf32, #tpu.memory_space<vmem>>, %arg8: memref<1x8x128xf32, #tpu.memory_space<vmem>>, %arg9: memref<1x10x128xbf16, #tpu.memory_space<vmem>>) attributes {dimension_semantics = [#tpu.dimension_semantics<parallel>], iteration_bounds = array<i64: 4>, scalar_prefetch = 0 : i64, scratch_operands = 1 : i64, tpu.core_type = #tpu.core_type<tc>, window_params = [{transform_indices = @transform_0, window_bounds = array<i64: 1, 8, 128>}, {pipeline_mode = #tpu.pipeline_mode<synchronous>, transform_indices = @transform_1, window_bounds = array<i64: 3, 128, 256>}, {pipeline_mode = #tpu.pipeline_mode<synchronous>, transform_indices = @transform_2, window_bounds = array<i64: 1, 256>}, {pipeline_mode = #tpu.pipeline_mode<synchronous>, transform_indices = @transform_3, window_bounds = array<i64: 16, 32>}, {pipeline_mode = #tpu.pipeline_mode<synchronous>, transform_indices = @transform_4, window_bounds = array<i64: 1, 32>}, {pipeline_mode = #tpu.pipeline_mode<synchronous>, transform_indices = @transform_5, window_bounds = array<i64: 32, 32>}, {pipeline_mode = #tpu.pipeline_mode<synchronous>, transform_indices = @transform_6, window_bounds = array<i64: 1, 32>}, {transform_indices = @transform_7, window_bounds = array<i64: 1, 8, 128>}]} {
    %cst = arith.constant 0.000000e+00 : bf16
    %0 = vector.broadcast %cst : bf16 to vector<1x1x128xbf16>
    %c0 = arith.constant 0 : index
    %c0_0 = arith.constant 0 : index
    %c0_1 = arith.constant 0 : index
    %1 = vector.load %arg9[%c0, %c0_0, %c0_1] : memref<1x10x128xbf16, #tpu.memory_space<vmem>>, vector<1x1x128xbf16>
    tpu.vector_store %arg9[%c0, %c0_0, %c0_1], %0 {strides = array<i32>} : memref<1x10x128xbf16, #tpu.memory_space<vmem>>, vector<1x1x128xbf16>,
    %c0_2 = arith.constant 0 : index
    %c9 = arith.constant 9 : index
    %c0_3 = arith.constant 0 : index
    %2 = vector.load %arg9[%c0_2, %c9, %c0_3] : memref<1x10x128xbf16, #tpu.memory_space<vmem>>, vector<1x1x128xbf16>
    tpu.vector_store %arg9[%c0_2, %c9, %c0_3], %0 {strides = array<i32>} : memref<1x10x128xbf16, #tpu.memory_space<vmem>>, vector<1x1x128xbf16>,
    %c0_4 = arith.constant 0 : index
    %c0_5 = arith.constant 0 : index
    %c0_6 = arith.constant 0 : index
    %3 = vector.load %arg1[%c0_4, %c0_5, %c0_6] : memref<1x8x128xf32, #tpu.memory_space<vmem>>, vector<1x8x128xf32>
    %4 = arith.truncf %3 : vector<1x8x128xf32> to vector<1x8x128xbf16>
    %c0_7 = arith.constant 0 : index
    %c1 = arith.constant 1 : index
    %c0_8 = arith.constant 0 : index
    %5 = vector.load %arg9[%c0_7, %c1, %c0_8] : memref<1x10x128xbf16, #tpu.memory_space<vmem>>, vector<1x8x128xbf16>
    tpu.vector_store %arg9[%c0_7, %c1, %c0_8], %4 {strides = array<i32>} : memref<1x10x128xbf16, #tpu.memory_space<vmem>>, vector<1x8x128xbf16>,
    %cst_9 = arith.constant 0.000000e+00 : f32
    %6 = vector.broadcast %cst_9 : f32 to vector<8x256xf32>
    %c0_10 = arith.constant 0 : index
    %c0_11 = arith.constant 0 : index
    %c0_12 = arith.constant 0 : index
    %7 = vector.load %arg9[%c0_10, %c0_11, %c0_12] : memref<1x10x128xbf16, #tpu.memory_space<vmem>>, vector<1x8x128xbf16>
    %8 = vector.shape_cast %7 : vector<1x8x128xbf16> to vector<8x128xbf16>
    %c0_13 = arith.constant 0 : index
    %c0_14 = arith.constant 0 : index
    %c0_15 = arith.constant 0 : index
    %9 = vector.load %arg2[%c0_13, %c0_14, %c0_15] : memref<3x128x256xbf16, #tpu.memory_space<vmem>>, vector<1x128x256xbf16>
    %10 = vector.shape_cast %9 : vector<1x128x256xbf16> to vector<128x256xbf16>
    %cst_16 = arith.constant dense<0.000000e+00> : vector<8x256xf32>
    %11 = tpu.matmul %8, %10, %cst_16 {dimension_numbers = #tpu.dot_dimension_numbers<[1], [0], [0], [1], [0, 0, 1, 1], [], []>} : vector<8x128xbf16>, vector<128x256xbf16>, vector<8x256xf32> -> vector<8x256xf32>
    %12 = arith.addf %6, %11 : vector<8x256xf32>
    %c0_17 = arith.constant 0 : index
    %c1_18 = arith.constant 1 : index
    %c0_19 = arith.constant 0 : index
    %13 = vector.load %arg9[%c0_17, %c1_18, %c0_19] : memref<1x10x128xbf16, #tpu.memory_space<vmem>>, vector<1x8x128xbf16>
    %14 = vector.shape_cast %13 : vector<1x8x128xbf16> to vector<8x128xbf16>
    %c1_20 = arith.constant 1 : index
    %c0_21 = arith.constant 0 : index
    %c0_22 = arith.constant 0 : index
    %15 = vector.load %arg2[%c1_20, %c0_21, %c0_22] : memref<3x128x256xbf16, #tpu.memory_space<vmem>>, vector<1x128x256xbf16>
    %16 = vector.shape_cast %15 : vector<1x128x256xbf16> to vector<128x256xbf16>
    %cst_23 = arith.constant dense<0.000000e+00> : vector<8x256xf32>
    %17 = tpu.matmul %14, %16, %cst_23 {dimension_numbers = #tpu.dot_dimension_numbers<[1], [0], [0], [1], [0, 0, 1, 1], [], []>} : vector<8x128xbf16>, vector<128x256xbf16>, vector<8x256xf32> -> vector<8x256xf32>
    %18 = arith.addf %12, %17 : vector<8x256xf32>
    %c0_24 = arith.constant 0 : index
    %c2 = arith.constant 2 : index
    %c0_25 = arith.constant 0 : index
    %19 = vector.load %arg9[%c0_24, %c2, %c0_25] : memref<1x10x128xbf16, #tpu.memory_space<vmem>>, vector<1x8x128xbf16>
    %20 = vector.shape_cast %19 : vector<1x8x128xbf16> to vector<8x128xbf16>
    %c2_26 = arith.constant 2 : index
    %c0_27 = arith.constant 0 : index
    %c0_28 = arith.constant 0 : index
    %21 = vector.load %arg2[%c2_26, %c0_27, %c0_28] : memref<3x128x256xbf16, #tpu.memory_space<vmem>>, vector<1x128x256xbf16>
    %22 = vector.shape_cast %21 : vector<1x128x256xbf16> to vector<128x256xbf16>
    %cst_29 = arith.constant dense<0.000000e+00> : vector<8x256xf32>
    %23 = tpu.matmul %20, %22, %cst_29 {dimension_numbers = #tpu.dot_dimension_numbers<[1], [0], [0], [1], [0, 0, 1, 1], [], []>} : vector<8x128xbf16>, vector<128x256xbf16>, vector<8x256xf32> -> vector<8x256xf32>
    %24 = arith.addf %18, %23 : vector<8x256xf32>
    %c0_30 = arith.constant 0 : index
    %c0_31 = arith.constant 0 : index
    %25 = vector.load %arg3[%c0_30, %c0_31] : memref<1x256xf32, #tpu.memory_space<vmem>>, vector<1x256xf32>
    %26 = vector.broadcast %25 : vector<1x256xf32> to vector<8x256xf32>
    %27 = arith.addf %24, %26 : vector<8x256xf32>
    %cst_32 = arith.constant 0.000000e+00 : f32
    %28 = vector.broadcast %cst_32 : f32 to vector<8x256xf32>
    %29 = arith.maximumf %27, %28 : vector<8x256xf32>
    %30 = vector.extract_strided_slice %29 {offsets = [0, 0], sizes = [8, 128], strides = [1, 1]} : vector<8x256xf32> to vector<8x128xf32>
    %31 = vector.extract_strided_slice %29 {offsets = [0, 128], sizes = [8, 128], strides = [1, 1]} : vector<8x256xf32> to vector<8x128xf32>
    %32 = arith.addf %30, %31 : vector<8x128xf32>
    %33 = vector.shape_cast %32 : vector<8x128xf32> to vector<1x8x128xf32>
    %cst_33 = arith.constant dense<0.000000e+00> : vector<1x128xf32>
    %34 = vector.multi_reduction <add>, %33, %cst_33 [1] : vector<1x8x128xf32> to vector<1x128xf32>
    %cst_34 = arith.constant 8.000000e+00 : f32
    %35 = vector.broadcast %cst_34 : f32 to vector<1x128xf32>
    %36 = arith.divf %34, %35 : vector<1x128xf32>
    %37 = vector.extract_strided_slice %36 {offsets = [0, 0], sizes = [1, 16], strides = [1, 1]} : vector<1x128xf32> to vector<1x16xf32>
    %38 = vector.extract_strided_slice %36 {offsets = [0, 16], sizes = [1, 16], strides = [1, 1]} : vector<1x128xf32> to vector<1x16xf32>
    %39 = arith.addf %37, %38 : vector<1x16xf32>
    %40 = vector.extract_strided_slice %36 {offsets = [0, 32], sizes = [1, 16], strides = [1, 1]} : vector<1x128xf32> to vector<1x16xf32>
    %41 = arith.addf %39, %40 : vector<1x16xf32>
    %42 = vector.extract_strided_slice %36 {offsets = [0, 48], sizes = [1, 16], strides = [1, 1]} : vector<1x128xf32> to vector<1x16xf32>
    %43 = arith.addf %41, %42 : vector<1x16xf32>
    %44 = vector.extract_strided_slice %36 {offsets = [0, 64], sizes = [1, 16], strides = [1, 1]} : vector<1x128xf32> to vector<1x16xf32>
    %45 = arith.addf %43, %44 : vector<1x16xf32>
    %46 = vector.extract_strided_slice %36 {offsets = [0, 80], sizes = [1, 16], strides = [1, 1]} : vector<1x128xf32> to vector<1x16xf32>
    %47 = arith.addf %45, %46 : vector<1x16xf32>
    %48 = vector.extract_strided_slice %36 {offsets = [0, 96], sizes = [1, 16], strides = [1, 1]} : vector<1x128xf32> to vector<1x16xf32>
    %49 = arith.addf %47, %48 : vector<1x16xf32>
    %50 = vector.extract_strided_slice %36 {offsets = [0, 112], sizes = [1, 16], strides = [1, 1]} : vector<1x128xf32> to vector<1x16xf32>
    %51 = arith.addf %49, %50 : vector<1x16xf32>
    %cst_35 = arith.constant 1.250000e-01 : f32
    %52 = vector.broadcast %cst_35 : f32 to vector<1x16xf32>
    %53 = arith.mulf %51, %52 : vector<1x16xf32>
    %54 = arith.truncf %53 : vector<1x16xf32> to vector<1x16xbf16>
    %c0_36 = arith.constant 0 : index
    %c0_37 = arith.constant 0 : index
    %55 = vector.load %arg4[%c0_36, %c0_37] : memref<16x32xbf16, #tpu.memory_space<vmem>>, vector<16x32xbf16>
    %cst_38 = arith.constant dense<0.000000e+00> : vector<1x32xf32>
    %56 = tpu.matmul %54, %55, %cst_38 {dimension_numbers = #tpu.dot_dimension_numbers<[1], [0], [0], [1], [0, 0, 1, 1], [], []>} : vector<1x16xbf16>, vector<16x32xbf16>, vector<1x32xf32> -> vector<1x32xf32>
    %c0_39 = arith.constant 0 : index
    %c0_40 = arith.constant 0 : index
    %57 = vector.load %arg5[%c0_39, %c0_40] : memref<1x32xf32, #tpu.memory_space<vmem>>, vector<1x32xf32>
    %58 = arith.addf %56, %57 : vector<1x32xf32>
    %cst_41 = arith.constant 0.000000e+00 : f32
    %59 = vector.broadcast %cst_41 : f32 to vector<1x32xf32>
    %60 = arith.maximumf %58, %59 : vector<1x32xf32>
    %61 = arith.truncf %60 : vector<1x32xf32> to vector<1x32xbf16>
    %c0_42 = arith.constant 0 : index
    %c0_43 = arith.constant 0 : index
    %62 = vector.load %arg6[%c0_42, %c0_43] : memref<32x32xbf16, #tpu.memory_space<vmem>>, vector<32x32xbf16>
    %cst_44 = arith.constant dense<0.000000e+00> : vector<1x32xf32>
    %63 = tpu.matmul %61, %62, %cst_44 {dimension_numbers = #tpu.dot_dimension_numbers<[1], [0], [0], [1], [0, 0, 1, 1], [], []>} : vector<1x32xbf16>, vector<32x32xbf16>, vector<1x32xf32> -> vector<1x32xf32>
    %c0_45 = arith.constant 0 : index
    %c0_46 = arith.constant 0 : index
    %64 = vector.load %arg7[%c0_45, %c0_46] : memref<1x32xf32, #tpu.memory_space<vmem>>, vector<1x32xf32>
    %65 = arith.addf %63, %64 : vector<1x32xf32>
    %66 = vector.extract_strided_slice %65 {offsets = [0, 0], sizes = [1, 16], strides = [1, 1]} : vector<1x32xf32> to vector<1x16xf32>
    %67 = vector.extract_strided_slice %65 {offsets = [0, 16], sizes = [1, 16], strides = [1, 1]} : vector<1x32xf32> to vector<1x16xf32>
    %68 = arith.maximumf %66, %67 : vector<1x16xf32>
    %69 = arith.subf %66, %68 : vector<1x16xf32>
    %70 = math.exp %69 : vector<1x16xf32>
    %71 = arith.subf %67, %68 : vector<1x16xf32>
    %72 = math.exp %71 : vector<1x16xf32>
    %73 = arith.addf %70, %72 : vector<1x16xf32>
    %74 = tpu.reciprocal %73 : vector<1x16xf32> -> vector<1x16xf32>
    %75 = arith.mulf %70, %74 : vector<1x16xf32>
    %76 = arith.mulf %72, %74 : vector<1x16xf32>
    %77 = tpu.concatenate %75, %75, %75, %75, %75, %75, %75, %75 in 1 : vector<1x16xf32>, vector<1x16xf32>, vector<1x16xf32>, vector<1x16xf32>, vector<1x16xf32>, vector<1x16xf32>, vector<1x16xf32>, vector<1x16xf32> -> vector<1x128xf32>
    %78 = vector.shape_cast %30 : vector<8x128xf32> to vector<1x8x128xf32>
    %79 = vector.shape_cast %77 : vector<1x128xf32> to vector<1x1x128xf32>
    %80 = vector.broadcast %79 : vector<1x1x128xf32> to vector<1x8x128xf32>
    %81 = arith.mulf %78, %80 : vector<1x8x128xf32>
    %82 = tpu.concatenate %76, %76, %76, %76, %76, %76, %76, %76 in 1 : vector<1x16xf32>, vector<1x16xf32>, vector<1x16xf32>, vector<1x16xf32>, vector<1x16xf32>, vector<1x16xf32>, vector<1x16xf32>, vector<1x16xf32> -> vector<1x128xf32>
    %83 = vector.shape_cast %31 : vector<8x128xf32> to vector<1x8x128xf32>
    %84 = vector.shape_cast %82 : vector<1x128xf32> to vector<1x1x128xf32>
    %85 = vector.broadcast %84 : vector<1x1x128xf32> to vector<1x8x128xf32>
    %86 = arith.mulf %83, %85 : vector<1x8x128xf32>
    %87 = arith.addf %81, %86 : vector<1x8x128xf32>
    %c0_47 = arith.constant 0 : index
    %c0_48 = arith.constant 0 : index
    %c0_49 = arith.constant 0 : index
    %88 = vector.load %arg8[%c0_47, %c0_48, %c0_49] : memref<1x8x128xf32, #tpu.memory_space<vmem>>, vector<1x8x128xf32>
    tpu.vector_store %arg8[%c0_47, %c0_48, %c0_49], %87 {strides = array<i32>} : memref<1x8x128xf32, #tpu.memory_space<vmem>>, vector<1x8x128xf32>,
    return
  }
  func.func @transform_0(%arg0: i32) -> (i32, i32, i32) {
    %c0_i32 = arith.constant 0 : i32
    %c0_i32_0 = arith.constant 0 : i32
    %c0_i32_1 = arith.constant 0 : i32
    return %arg0, %c0_i32, %c0_i32_0 : i32, i32, i32
  }
  func.func @transform_1(%arg0: i32) -> (i32, i32, i32) {
    %c0_i32 = arith.constant 0 : i32
    %c0_i32_0 = arith.constant 0 : i32
    %c0_i32_1 = arith.constant 0 : i32
    %c0_i32_2 = arith.constant 0 : i32
    return %c0_i32, %c0_i32_0, %c0_i32_1 : i32, i32, i32
  }
  func.func @transform_2(%arg0: i32) -> (i32, i32) {
    %c0_i32 = arith.constant 0 : i32
    %c0_i32_0 = arith.constant 0 : i32
    %c0_i32_1 = arith.constant 0 : i32
    return %c0_i32, %c0_i32_0 : i32, i32
  }
  func.func @transform_3(%arg0: i32) -> (i32, i32) {
    %c0_i32 = arith.constant 0 : i32
    %c0_i32_0 = arith.constant 0 : i32
    %c0_i32_1 = arith.constant 0 : i32
    return %c0_i32, %c0_i32_0 : i32, i32
  }
  func.func @transform_4(%arg0: i32) -> (i32, i32) {
    %c0_i32 = arith.constant 0 : i32
    %c0_i32_0 = arith.constant 0 : i32
    %c0_i32_1 = arith.constant 0 : i32
    return %c0_i32, %c0_i32_0 : i32, i32
  }
  func.func @transform_5(%arg0: i32) -> (i32, i32) {
    %c0_i32 = arith.constant 0 : i32
    %c0_i32_0 = arith.constant 0 : i32
    %c0_i32_1 = arith.constant 0 : i32
    return %c0_i32, %c0_i32_0 : i32, i32
  }
  func.func @transform_6(%arg0: i32) -> (i32, i32) {
    %c0_i32 = arith.constant 0 : i32
    %c0_i32_0 = arith.constant 0 : i32
    %c0_i32_1 = arith.constant 0 : i32
    return %c0_i32, %c0_i32_0 : i32, i32
  }
  func.func @transform_7(%arg0: i32) -> (i32, i32, i32) {
    %c0_i32 = arith.constant 0 : i32
    %c0_i32_0 = arith.constant 0 : i32
    %c0_i32_1 = arith.constant 0 : i32
    return %arg0, %c0_i32, %c0_i32_0 : i32, i32, i32
  }
}

</mosaic_0001>

<llo_original>
// kernel: tpu_custom_call.1
$region0: #{tpu_custom_call.1}
  #allocation0 [shape = 'u32[]', space=smem, size = 0x4, offset = 0x4, fixed_abs, tag = 'smem constant byte address 0x4 - core index']
  #allocation1 [shape = 'u32[144,128]{1,0:T(1,128)}', space=vmem, size = 0x12000, scoped, tag = 'internal scratch']
  #allocation2 [shape = 'bf16[1,10,128]{2,1,0:T(8,128)(2,1)}', space=vmem, size = 0x1000, scoped, tag = 'scratch operand']
  %s0 = inlined_call_operand.hbm [shape: f32[4,8,128], index: 0, kind: input, shape index: {}]
  %s1 = inlined_call_operand.hbm [shape: bf16[3,128,256], index: 1, kind: input, shape index: {}]
  %s2 = inlined_call_operand.vmem [shape: f32[1,256], index: 2, kind: input, shape index: {}]
  %s3 = inlined_call_operand.hbm [shape: bf16[16,32], index: 3, kind: input, shape index: {}]
  %s4 = inlined_call_operand.hbm [shape: f32[1,32], index: 4, kind: input, shape index: {}]
  %s5 = inlined_call_operand.vmem [shape: bf16[32,32], index: 5, kind: input, shape index: {}]
  %s6 = inlined_call_operand.vmem [shape: f32[1,32], index: 6, kind: input, shape index: {}]
  %s7 = inlined_call_operand.hbm [shape: f32[4,8,128], index: 7, kind: output, shape index: {}]
  %s8 = sld [smem:[#allocation0]]
  $region77: #{tpu_custom_call.1} parent=0
    _
  %s10 = ssub.s32 1, %s8
  %s11 = scalar_select 0, %s10, %s8
  $region1: #{tpu_custom_call.1} parent=0
    #allocation3 [shape = 'u8[8192]{0}', space=vmem, size = 0x2000, scoped, tag = 'input window, operand 0']
    #allocation4 [shape = 's32[2]{0}', space=sflag, size = 0x8, scoped, tag = 'scoped memory for tpu_custom_call.1']
    #allocation5 [shape = 's32[2]{0}', space=sflag, size = 0x8, scoped, tag = 'scoped memory for tpu_custom_call.1']
    #allocation6 [shape = 'u8[196608]{0}', space=vmem, size = 0x30000, scoped, tag = 'input window, operand 1, single buffered']
    #allocation7 [shape = 's32[1]{0}', space=sflag, size = 0x4, scoped, tag = 'scoped memory for tpu_custom_call.1']
    #allocation8 [shape = 'u8[4096]{0}', space=vmem, size = 0x1000, scoped, tag = 'input window, operand 3, single buffered']
    #allocation9 [shape = 'u8[512]{0}', space=vmem, size = 0x400, scoped, tag = 'input window, operand 4, single buffered']
    #allocation10 [shape = 's32[1]{0}', space=sflag, size = 0x4, scoped, tag = 'scoped memory for tpu_custom_call.1']
    #allocation11 [shape = 'u8[8192]{0}', space=vmem, size = 0x2000, scoped, tag = 'output window, operand 0']
    %12 = vsyncpa [#allocation4], 0
    %s13 = scalar_lea.sflag [#allocation4], 1
    %14 = vsyncpa %s13, 0
    %15 = vsyncpa [#allocation7], 0
    %16 = vsyncpa [#allocation10], 0
    %17 = vsyncpa [#allocation5], 0
    %s18 = scalar_lea.sflag [#allocation5], 1
    %19 = vsyncpa %s18, 0
    loop: start=0, step=1, limit=6
    $region2: #{tpu_custom_call.1} parent=1 // loop_pre_header
      _
    $region3: #{tpu_custom_call.1} parent=1 // loop_header
      %s21 = sphi 0, %s25
      %p22 = scmp.ge.s32.totalorder %s21, 6
      %s31 = sphi 0, %s33
      %s34 = sphi 0, %s31
      %s35 = sphi 0, %s34
      %s51 = sphi 0, %s35
      %s55 = sphi 0, %s55
      %s57 = sphi 0, %s55
      %s58 = sphi 0, %s57
      %s72 = sphi 0, %s58
      %s76 = sphi 0, %s76
      %s78 = sphi 0, %s76
      %s79 = sphi 0, %s78
      %s93 = sphi 0, %s79
      %s97 = sphi 0, %s97
      %s99 = sphi 0, %s97
      %s100 = sphi 0, %s99
      %s114 = sphi 0, %s100
      %s118 = sphi 0, %s118
      %s120 = sphi 0, %s118
      %s121 = sphi 0, %s120
      %s135 = sphi 0, %s121
      %s139 = sphi 0, %s139
      %s141 = sphi 0, %s139
      %s142 = sphi 0, %s141
      %s156 = sphi 0, %s142
      %s160 = sphi 0, %s160
      %s162 = sphi 0, %s160
      %s163 = sphi 0, %s162
      %s177 = sphi 0, %s163
      %s183 = sphi 0, %s185
      %s186 = sphi 0, %s183
      %s187 = sphi 0, %s186
      %s203 = sphi 0, %s187
    $region4: #{tpu_custom_call.1} parent=1 // loop_header_branch
      %24 = sbr.rel (%p22) target = $region8
    $region5: #{tpu_custom_call.1} parent=1 // loop_body
      %s26 = ssub.s32 %s21, 1
      %s27 = ssub.s32 %s21, 2
      %s28 = sadd.s32 %s21, 1
      %s29 = ssub.s32 %s21, %s28
      %p30 = scmp.eq.s32.totalorder %s29, 0
      %s32 = sadd.s32 %s31, 1
      %s33 = scalar_select %p30, %s31, %s32
      %p36 = pneg %p30
      %p37 = scmp.eq.s32.totalorder %s21, 3
      %p38 = por %p36, %p37
      %p39 = scmp.ne.s32.totalorder %s31, %s34
      %p40 = scmp.eq.s32.totalorder %s21, 0
      %p41 = por %p39, %p40
      %p42 = scmp.ne.s32.totalorder %s31, %s34
      %p43 = scmp.eq.s32.totalorder %s26, 3
      %p44 = por %p42, %p43
      %p45 = scmp.ne.s32.totalorder %s34, %s35
      %p46 = scmp.eq.s32.totalorder %s26, 0
      %p47 = por %p45, %p46
      %p48 = scmp.ne.s32.totalorder %s34, %s35
      %p49 = scmp.eq.s32.totalorder %s27, 3
      %p50 = por %p48, %p49
      %p52 = scmp.ne.s32.totalorder %s35, %s51
      %p53 = scmp.eq.s32.totalorder %s27, 0
      %p54 = por %p52, %p53
      %s56 = sadd.s32 %s55, 1
      %p59 = scmp.eq.s32.totalorder %s21, 3
      %p60 = scmp.ne.s32.totalorder %s55, %s57
      %p61 = scmp.eq.s32.totalorder %s21, 0
      %p62 = por %p60, %p61
      %p63 = scmp.ne.s32.totalorder %s55, %s57
      %p64 = scmp.eq.s32.totalorder %s26, 3
      %p65 = por %p63, %p64
      %p66 = scmp.ne.s32.totalorder %s57, %s58
      %p67 = scmp.eq.s32.totalorder %s26, 0
      %p68 = por %p66, %p67
      %p69 = scmp.ne.s32.totalorder %s57, %s58
      %p70 = scmp.eq.s32.totalorder %s27, 3
      %p71 = por %p69, %p70
      %p73 = scmp.ne.s32.totalorder %s58, %s72
      %p74 = scmp.eq.s32.totalorder %s27, 0
      %p75 = por %p73, %p74
      %s77 = sadd.s32 %s76, 1
      %p80 = scmp.eq.s32.totalorder %s21, 3
      %p81 = scmp.ne.s32.totalorder %s76, %s78
      %p82 = scmp.eq.s32.totalorder %s21, 0
      %p83 = por %p81, %p82
      %p84 = scmp.ne.s32.totalorder %s76, %s78
      %p85 = scmp.eq.s32.totalorder %s26, 3
      %p86 = por %p84, %p85
      %p87 = scmp.ne.s32.totalorder %s78, %s79
      %p88 = scmp.eq.s32.totalorder %s26, 0
      %p89 = por %p87, %p88
      %p90 = scmp.ne.s32.totalorder %s78, %s79
      %p91 = scmp.eq.s32.totalorder %s27, 3
      %p92 = por %p90, %p91
      %p94 = scmp.ne.s32.totalorder %s79, %s93
      %p95 = scmp.eq.s32.totalorder %s27, 0
      %p96 = por %p94, %p95
      %s98 = sadd.s32 %s97, 1
      %p101 = scmp.eq.s32.totalorder %s21, 3
      %p102 = scmp.ne.s32.totalorder %s97, %s99
      %p103 = scmp.eq.s32.totalorder %s21, 0
      %p104 = por %p102, %p103
      %p105 = scmp.ne.s32.totalorder %s97, %s99
      %p106 = scmp.eq.s32.totalorder %s26, 3
      %p107 = por %p105, %p106
      %p108 = scmp.ne.s32.totalorder %s99, %s100
      %p109 = scmp.eq.s32.totalorder %s26, 0
      %p110 = por %p108, %p109
      %p111 = scmp.ne.s32.totalorder %s99, %s100
      %p112 = scmp.eq.s32.totalorder %s27, 3
      %p113 = por %p111, %p112
      %p115 = scmp.ne.s32.totalorder %s100, %s114
      %p116 = scmp.eq.s32.totalorder %s27, 0
      %p117 = por %p115, %p116
      %s119 = sadd.s32 %s118, 1
      %p122 = scmp.eq.s32.totalorder %s21, 3
      %p123 = scmp.ne.s32.totalorder %s118, %s120
      %p124 = scmp.eq.s32.totalorder %s21, 0
      %p125 = por %p123, %p124
      %p126 = scmp.ne.s32.totalorder %s118, %s120
      %p127 = scmp.eq.s32.totalorder %s26, 3
      %p128 = por %p126, %p127
      %p129 = scmp.ne.s32.totalorder %s120, %s121
      %p130 = scmp.eq.s32.totalorder %s26, 0
      %p131 = por %p129, %p130
      %p132 = scmp.ne.s32.totalorder %s120, %s121
      %p133 = scmp.eq.s32.totalorder %s27, 3
      %p134 = por %p132, %p133
      %p136 = scmp.ne.s32.totalorder %s121, %s135
      %p137 = scmp.eq.s32.totalorder %s27, 0
      %p138 = por %p136, %p137
      %s140 = sadd.s32 %s139, 1
      %p143 = scmp.eq.s32.totalorder %s21, 3
      %p144 = scmp.ne.s32.totalorder %s139, %s141
      %p145 = scmp.eq.s32.totalorder %s21, 0
      %p146 = por %p144, %p145
      %p147 = scmp.ne.s32.totalorder %s139, %s141
      %p148 = scmp.eq.s32.totalorder %s26, 3
      %p149 = por %p147, %p148
      %p150 = scmp.ne.s32.totalorder %s141, %s142
      %p151 = scmp.eq.s32.totalorder %s26, 0
      %p152 = por %p150, %p151
      %p153 = scmp.ne.s32.totalorder %s141, %s142
      %p154 = scmp.eq.s32.totalorder %s27, 3
      %p155 = por %p153, %p154
      %p157 = scmp.ne.s32.totalorder %s142, %s156
      %p158 = scmp.eq.s32.totalorder %s27, 0
      %p159 = por %p157, %p158
      %s161 = sadd.s32 %s160, 1
      %p164 = scmp.eq.s32.totalorder %s21, 3
      %p165 = scmp.ne.s32.totalorder %s160, %s162
      %p166 = scmp.eq.s32.totalorder %s21, 0
      %p167 = por %p165, %p166
      %p168 = scmp.ne.s32.totalorder %s160, %s162
      %p169 = scmp.eq.s32.totalorder %s26, 3
      %p170 = por %p168, %p169
      %p171 = scmp.ne.s32.totalorder %s162, %s163
      %p172 = scmp.eq.s32.totalorder %s26, 0
      %p173 = por %p171, %p172
      %p174 = scmp.ne.s32.totalorder %s162, %s163
      %p175 = scmp.eq.s32.totalorder %s27, 3
      %p176 = por %p174, %p175
      %p178 = scmp.ne.s32.totalorder %s163, %s177
      %p179 = scmp.eq.s32.totalorder %s27, 0
      %p180 = por %p178, %p179
      %s181 = ssub.s32 %s21, %s28
      %p182 = scmp.eq.s32.totalorder %s181, 0
      %s184 = sadd.s32 %s183, 1
      %s185 = scalar_select %p182, %s183, %s184
      %p188 = pneg %p182
      %p189 = scmp.eq.s32.totalorder %s21, 3
      %p190 = por %p188, %p189
      %p191 = scmp.ne.s32.totalorder %s183, %s186
      %p192 = scmp.eq.s32.totalorder %s21, 0
      %p193 = por %p191, %p192
      %p194 = scmp.ne.s32.totalorder %s183, %s186
      %p195 = scmp.eq.s32.totalorder %s26, 3
      %p196 = por %p194, %p195
      %p197 = scmp.ne.s32.totalorder %s186, %s187
      %p198 = scmp.eq.s32.totalorder %s26, 0
      %p199 = por %p197, %p198
      %p200 = scmp.ne.s32.totalorder %s186, %s187
      %p201 = scmp.eq.s32.totalorder %s27, 3
      %p202 = por %p200, %p201
      %p204 = scmp.ne.s32.totalorder %s187, %s203
      %p205 = scmp.eq.s32.totalorder %s27, 0
      %p206 = por %p204, %p205
      %p207 = scmp.le.s32.totalorder 1, %s21
      %p208 = scmp.lt.s32.totalorder %s21, 5
      %p209 = pnand %p207, %p208
      %p210 = pneg %p209
      // Predicated region
      $region9: #{tpu_custom_call.1} parent=5 // pred_check
        _
      $region10: #{tpu_custom_call.1} parent=5 // pred_check_branch
        %212 = sbr.rel (%p209) target = $region12
      $region11: #{tpu_custom_call.1} parent=5 // pred_region
        %s213 = ssub.s32 %s21, 1
        // Predicated region
        $region13: #{tpu_custom_call.1} parent=11 // pred_check
          %p214 = pneg %p68
        $region14: #{tpu_custom_call.1} parent=11 // pred_check_branch
          %216 = sbr.rel (%p214) target = $region16
        $region15: #{tpu_custom_call.1} parent=11 // pred_region
          %s218 = ssub.s32 6144, 6144
          %219 = vsyncadd [#allocation7], %s218
          %s220 = sshll.u32 [#allocation6], 4
          %s221 = int_to_ptr.vmem [resolvable:$true] %s220
          %226 = dma.hbm_to_vmem [thread:$0]  %s1, 6144, %s221, [#allocation7], 128, 128, 8
        $region16: #{tpu_custom_call.1} parent=11 // pred_fallthru
          _
        // Predicated region
        $region17: #{tpu_custom_call.1} parent=11 // pred_check
          %p227 = pneg %p89
        $region18: #{tpu_custom_call.1} parent=11 // pred_check_branch
          %229 = sbr.rel (%p227) target = $region20
        $region19: #{tpu_custom_call.1} parent=11 // pred_region
          _
        $region20: #{tpu_custom_call.1} parent=11 // pred_fallthru
          _
        // Predicated region
        $region21: #{tpu_custom_call.1} parent=11 // pred_check
          %p230 = pneg %p110
        $region22: #{tpu_custom_call.1} parent=11 // pred_check_branch
          %232 = sbr.rel (%p230) target = $region24
        $region23: #{tpu_custom_call.1} parent=11 // pred_region
          %s234 = ssub.s32 128, 128
          %235 = vsyncadd [#allocation7], %s234
          %s236 = sshll.u32 [#allocation8], 4
          %s237 = int_to_ptr.vmem [resolvable:$true] %s236
          %242 = dma.hbm_to_vmem [thread:$0]  %s3, 128, %s237, [#allocation7], 64, 64, 4
        $region24: #{tpu_custom_call.1} parent=11 // pred_fallthru
          _
        // Predicated region
        $region25: #{tpu_custom_call.1} parent=11 // pred_check
          %p243 = pneg %p131
        $region26: #{tpu_custom_call.1} parent=11 // pred_check_branch
          %245 = sbr.rel (%p243) target = $region28
        $region27: #{tpu_custom_call.1} parent=11 // pred_region
          %s247 = ssub.s32 16, 16
          %248 = vsyncadd [#allocation10], %s247
          %s250 = sshll.u32 [#allocation9], 4
          %s251 = int_to_ptr.vmem [resolvable:$true] %s250
          %253 = dma.hbm_to_vmem [thread:$0]  %s4, 16, %s251, [#allocation10]
        $region28: #{tpu_custom_call.1} parent=11 // pred_fallthru
          _
        // Predicated region
        $region29: #{tpu_custom_call.1} parent=11 // pred_check
          %p254 = pneg %p152
        $region30: #{tpu_custom_call.1} parent=11 // pred_check_branch
          %256 = sbr.rel (%p254) target = $region32
        $region31: #{tpu_custom_call.1} parent=11 // pred_region
          _
        $region32: #{tpu_custom_call.1} parent=11 // pred_fallthru
          _
        // Predicated region
        $region33: #{tpu_custom_call.1} parent=11 // pred_check
          %p257 = pneg %p173
        $region34: #{tpu_custom_call.1} parent=11 // pred_check_branch
          %259 = sbr.rel (%p257) target = $region36
        $region35: #{tpu_custom_call.1} parent=11 // pred_region
          _
        $region36: #{tpu_custom_call.1} parent=11 // pred_fallthru
          _
      $region12: #{tpu_custom_call.1} parent=5 // pred_fallthru
        _
      %p260 = scmp.lt.s32.totalorder %s21, 4
      // Predicated region
      $region37: #{tpu_custom_call.1} parent=5 // pred_check
        %p261 = pneg %p260
      $region38: #{tpu_custom_call.1} parent=5 // pred_check_branch
        %263 = sbr.rel (%p261) target = $region40
      $region39: #{tpu_custom_call.1} parent=5 // pred_region
        // Predicated region
        $region41: #{tpu_custom_call.1} parent=39 // pred_check
          %p264 = pneg %p41
        $region42: #{tpu_custom_call.1} parent=39 // pred_check_branch
          %266 = sbr.rel (%p264) target = $region44
        $region43: #{tpu_custom_call.1} parent=39 // pred_region
          %s267 = sand.u32 %s31, 1
          %s268 = scalar_lea.sflag [#allocation4], %s267
          %s269 = sand.u32 %s31, 1
          %s270 = smul.addr %s269, 8
          %s271 = scalar_lea.vmem [#allocation3], %s270
          %s273 = ssub.s32 128, 128
          %274 = vsyncadd %s268, %s273
          %s275 = smul.addr %s21, 128
          %s276 = scalar_lea.hbm %s0, %s275
          %s278 = sshll.u32 %s271, 4
          %s279 = int_to_ptr.vmem [resolvable:$true] %s278
          %281 = dma.hbm_to_vmem [thread:$0]  %s276, 128, %s279, %s268
        $region44: #{tpu_custom_call.1} parent=39 // pred_fallthru
          _
      $region40: #{tpu_custom_call.1} parent=5 // pred_fallthru
        _
      %p282 = scmp.le.s32.totalorder 1, %s21
      %p283 = scmp.lt.s32.totalorder %s21, 5
      %p284 = pnand %p282, %p283
      %p285 = pneg %p284
      // Predicated region
      $region45: #{tpu_custom_call.1} parent=5 // pred_check
        _
      $region46: #{tpu_custom_call.1} parent=5 // pred_check_branch
        %287 = sbr.rel (%p284) target = $region48
      $region47: #{tpu_custom_call.1} parent=5 // pred_region
        %s288 = ssub.s32 %s21, 1
        %s289 = sand.u32 %s34, 1
        %s290 = scalar_lea.sflag [#allocation4], %s289
        %s291 = sand.u32 %s34, 1
        %s292 = smul.addr %s291, 8
        %s293 = scalar_lea.vmem [#allocation3], %s292
        // Predicated region
        $region49: #{tpu_custom_call.1} parent=47 // pred_check
          %p294 = pneg %p47
        $region50: #{tpu_custom_call.1} parent=47 // pred_check_branch
          %296 = sbr.rel (%p294) target = $region52
        $region51: #{tpu_custom_call.1} parent=47 // pred_region
          %297 = dma.done %s290, 128
        $region52: #{tpu_custom_call.1} parent=47 // pred_fallthru
          _
        // Predicated region
        $region53: #{tpu_custom_call.1} parent=47 // pred_check
          %p298 = pneg %p68
        $region54: #{tpu_custom_call.1} parent=47 // pred_check_branch
          %300 = sbr.rel (%p298) target = $region56
        $region55: #{tpu_custom_call.1} parent=47 // pred_region
          %301 = dma.done [#allocation7], 6144
        $region56: #{tpu_custom_call.1} parent=47 // pred_fallthru
          _
        // Predicated region
        $region57: #{tpu_custom_call.1} parent=47 // pred_check
          %p302 = pneg %p110
        $region58: #{tpu_custom_call.1} parent=47 // pred_check_branch
          %304 = sbr.rel (%p302) target = $region60
        $region59: #{tpu_custom_call.1} parent=47 // pred_region
          %305 = dma.done [#allocation7], 128
        $region60: #{tpu_custom_call.1} parent=47 // pred_fallthru
          _
        // Predicated region
        $region61: #{tpu_custom_call.1} parent=47 // pred_check
          %p306 = pneg %p131
        $region62: #{tpu_custom_call.1} parent=47 // pred_check_branch
          %308 = sbr.rel (%p306) target = $region64
        $region63: #{tpu_custom_call.1} parent=47 // pred_region
          %309 = dma.done [#allocation10], 16
        $region64: #{tpu_custom_call.1} parent=47 // pred_fallthru
          _
        %s310 = sand.u32 %s34, 1
        %s311 = scalar_lea.sflag [#allocation4], %s310
        %s312 = sand.u32 %s34, 1
        %s313 = smul.addr %s312, 8
        %s314 = scalar_lea.vmem [#allocation3], %s313
        %p315 = pneg %p47
        %p316 = pneg %p44
        %p317 = pneg %p68
        %p318 = pneg %p65
        %p319 = pneg %p89
        %p320 = pneg %p86
        %p321 = pneg %p110
        %p322 = pneg %p107
        %p323 = pneg %p131
        %p324 = pneg %p128
        %p325 = pneg %p152
        %p326 = pneg %p149
        %p327 = pneg %p173
        %p328 = pneg %p170
        %p329 = pneg %p199
        %p330 = pneg %p196
        %s331 = sand.u32 %s186, 1
        %s332 = scalar_lea.sflag [#allocation5], %s331
        %s333 = sand.u32 %s186, 1
        %s334 = smul.addr %s333, 8
        %s335 = scalar_lea.vmem [#allocation11], %s334
        %vm337 = vcmask 1040384
        %vm338 = vsmask.f32 256
        %vm339 = vmand %vm337, %vm338
        %v340 = vld [vmem:[#allocation2] sm:$0x1]
        %v341 = vsel %vm339, 0, %v340
        %342 = vst [vmem:[#allocation2] sm:$0x1] %v341
        %vm343 = vsmask.f32 7938
        %vm344 = vmand %vm337, %vm343
        %v345 = vld [vmem:[#allocation2 + $0x4] sm:$0x1]
        %v346 = vsel %vm344, 0, %v345
        %347 = vst [vmem:[#allocation2 + $0x4] sm:$0x1] %v346
        %v348 = vld [vmem:[%s293] sm:$0xff]
        %v349 = vpack.c.bf16 %v348, %v348
        %v351 = vunpack.c.l.b16 %v349
        %v352 = vpack.c.b16 %v351, %v351
        %v354 = vshrl.u32 %v352, 16
        %v356 = vrot.slane %v354, 7
        %v357 = vshll.u32 %v352, 16
        %v359 = vor.u32 %v356, %v357
        %v360 = vrot.slane %v356, 4
        %vm363 = vcmask 1043456
        %vm364 = vmand %vm363, %vm343
        %v365 = vld [vmem:[#allocation2] sm:$0xf]
        %v366 = vsel %vm364, %v359, %v365
        %367 = vst [vmem:[#allocation2] sm:$0xf] %v366
        %v368 = vld [vmem:[#allocation2 + $0x4] sm:$0x1]
        %v369 = vsel %vm339, %v360, %v368
        %370 = vst [vmem:[#allocation2 + $0x4] sm:$0x1] %v369
        %v371 = vld [vmem:[#allocation2] sm:$0xf]
        %v372 = vld [vmem:[#allocation6] sm:$0xff]
        %v373 = vld [vmem:[#allocation6 + $0x8] sm:$0xff]
        %v374 = vld [vmem:[#allocation6 + $0x10] sm:$0xff]
        %v375 = vld [vmem:[#allocation6 + $0x18] sm:$0xff]
        %v376 = vld [vmem:[#allocation6 + $0x20] sm:$0xff]
        %v377 = vld [vmem:[#allocation6 + $0x28] sm:$0xff]
        %v378 = vld [vmem:[#allocation6 + $0x30] sm:$0xff]
        %v379 = vld [vmem:[#allocation6 + $0x38] sm:$0xff]
        %v380 = vld [vmem:[#allocation6 + $0x40] sm:$0xff]
        %v381 = vld [vmem:[#allocation6 + $0x48] sm:$0xff]
        %v382 = vld [vmem:[#allocation6 + $0x50] sm:$0xff]
        %v383 = vld [vmem:[#allocation6 + $0x58] sm:$0xff]
        %v384 = vld [vmem:[#allocation6 + $0x60] sm:$0xff]
        %v385 = vld [vmem:[#allocation6 + $0x68] sm:$0xff]
        %v386 = vld [vmem:[#allocation6 + $0x70] sm:$0xff]
        %v387 = vld [vmem:[#allocation6 + $0x78] sm:$0xff]
        %v388 = vld [vmem:[#allocation2 + $0x4] sm:$0x1]
        %s389 = scalar_lea.vmem [#allocation6], 128
        %v390 = vld [vmem:[%s389] sm:$0xff]
        %v391 = vld [vmem:[%s389 + $0x8] sm:$0xff]
        %v392 = vld [vmem:[%s389 + $0x10] sm:$0xff]
        %v393 = vld [vmem:[%s389 + $0x18] sm:$0xff]
        %v394 = vld [vmem:[%s389 + $0x20] sm:$0xff]
        %v395 = vld [vmem:[%s389 + $0x28] sm:$0xff]
        %v396 = vld [vmem:[%s389 + $0x30] sm:$0xff]
        %v397 = vld [vmem:[%s389 + $0x38] sm:$0xff]
        %v398 = vld [vmem:[%s389 + $0x40] sm:$0xff]
        %v399 = vld [vmem:[%s389 + $0x48] sm:$0xff]
        %v400 = vld [vmem:[%s389 + $0x50] sm:$0xff]
        %v401 = vld [vmem:[%s389 + $0x58] sm:$0xff]
        %v402 = vld [vmem:[%s389 + $0x60] sm:$0xff]
        %v403 = vld [vmem:[%s389 + $0x68] sm:$0xff]
        %v404 = vld [vmem:[%s389 + $0x70] sm:$0xff]
        %v405 = vld [vmem:[%s389 + $0x78] sm:$0xff]
        %v408 = vunpack.c.l.b16 %v371
        %v409 = vunpack.c.l.b16 %v388
        %v410 = vpack.c.b16 %v409, %v408
        %v412 = vshrl.u32 %v410, 16
        %v414 = vshll.u32 %v410, 16
        %v416 = vrot.slane %v414, 1
        %v417 = vor.u32 %v412, %v416
        %v435 = vunpack.c.l.b16 %v390
        %v436 = vunpack.c.h.b16 %v390
        %v437 = vunpack.c.l.b16 %v391
        %v438 = vunpack.c.h.b16 %v391
        %v439 = vunpack.c.l.b16 %v392
        %v440 = vunpack.c.h.b16 %v392
        %v441 = vunpack.c.l.b16 %v393
        %v442 = vunpack.c.h.b16 %v393
        %v443 = vunpack.c.l.b16 %v394
        %v444 = vunpack.c.h.b16 %v394
        %v445 = vunpack.c.l.b16 %v395
        %v446 = vunpack.c.h.b16 %v395
        %v447 = vunpack.c.l.b16 %v396
        %v448 = vunpack.c.h.b16 %v396
        %v449 = vunpack.c.l.b16 %v397
        %v450 = vunpack.c.h.b16 %v397
        %v451 = vunpack.c.l.b16 %v398
        %v452 = vunpack.c.h.b16 %v398
        %v453 = vunpack.c.l.b16 %v399
        %v454 = vunpack.c.h.b16 %v399
        %v455 = vunpack.c.l.b16 %v400
        %v456 = vunpack.c.h.b16 %v400
        %v457 = vunpack.c.l.b16 %v401
        %v458 = vunpack.c.h.b16 %v401
        %v459 = vunpack.c.l.b16 %v402
        %v460 = vunpack.c.h.b16 %v402
        %v461 = vunpack.c.l.b16 %v403
        %v462 = vunpack.c.h.b16 %v403
        %v463 = vunpack.c.l.b16 %v404
        %v464 = vunpack.c.h.b16 %v404
        %v465 = vunpack.c.l.b16 %v405
        %v466 = vunpack.c.h.b16 %v405
        %v467 = vpack.c.b16 %v437, %v435
        %v468 = vpack.c.b16 %v438, %v436
        %v469 = vpack.c.b16 %v441, %v439
        %v470 = vpack.c.b16 %v442, %v440
        %v471 = vpack.c.b16 %v445, %v443
        %v472 = vpack.c.b16 %v446, %v444
        %v473 = vpack.c.b16 %v449, %v447
        %v474 = vpack.c.b16 %v450, %v448
        %v475 = vpack.c.b16 %v453, %v451
        %v476 = vpack.c.b16 %v454, %v452
        %v477 = vpack.c.b16 %v457, %v455
        %v478 = vpack.c.b16 %v458, %v456
        %v479 = vpack.c.b16 %v461, %v459
        %v480 = vpack.c.b16 %v462, %v460
        %v481 = vpack.c.b16 %v465, %v463
        %v482 = vpack.c.b16 %v466, %v464
        %499 = vmatprep.subr.bf16.mxu0 %v468
        %500 = vmatpush1.bf16.msra.mxu0 %v467
        %501 = vmatprep.subr.bf16.mxu0 %v470
        %502 = vmatpush1.bf16.msra.mxu0 %v469
        %503 = vmatprep.subr.bf16.mxu0 %v472
        %504 = vmatpush1.bf16.msra.mxu0 %v471
        %505 = vmatprep.subr.bf16.mxu0 %v474
        %506 = vmatpush1.bf16.msra.mxu0 %v473
        %507 = vmatprep.subr.bf16.mxu0 %v476
        %508 = vmatpush1.bf16.msra.mxu0 %v475
        %509 = vmatprep.subr.bf16.mxu0 %v478
        %510 = vmatpush1.bf16.msra.mxu0 %v477
        %511 = vmatprep.subr.bf16.mxu0 %v480
        %512 = vmatpush1.bf16.msra.mxu0 %v479
        %513 = vmatprep.subr.bf16.mxu0 %v482
        %514 = vmatpush1.bf16.msra.mxu0 %v481
        %515 = vmatprep.subr.bf16.mxu0 0
        %516 = vmatpush1.bf16.msra.mxu0 0
        %517 = vmatprep.subr.bf16.mxu0 0
        %518 = vmatpush1.bf16.msra.mxu0 0
        %519 = vmatprep.subr.bf16.mxu0 0
        %520 = vmatpush1.bf16.msra.mxu0 0
        %521 = vmatprep.subr.bf16.mxu0 0
        %522 = vmatpush1.bf16.msra.mxu0 0
        %523 = vmatprep.subr.bf16.mxu0 0
        %524 = vmatpush1.bf16.msra.mxu0 0
        %525 = vmatprep.subr.bf16.mxu0 0
        %526 = vmatpush1.bf16.msra.mxu0 0
        %527 = vmatprep.subr.bf16.mxu0 0
        %528 = vmatpush1.bf16.msra.mxu0 0
        %529 = vmatprep.subr.bf16.mxu0 0
        %530 = vmatpush1.bf16.msra.mxu0 0
        %531 = vmatprep.mubr.bf16.mxu0 0
        %532 = vmatmul.mubr.bf16.gmra.mrb[0].mxu0 %v417
        %v533 = vpop.f32.mrb[0].mxu0
        %v534 = vadd.f32 0.0, %v533
        %v535 = vpop.f32.mrb[0].mxu0
        %v536 = vadd.f32 0.0, %v535
        %v537 = vpop.f32.mrb[0].mxu0
        %v538 = vpop.f32.mrb[0].mxu0
        %539 = vdwg.mxu0
        %v556 = vunpack.c.l.b16 %v372
        %v557 = vunpack.c.h.b16 %v372
        %v558 = vunpack.c.l.b16 %v373
        %v559 = vunpack.c.h.b16 %v373
        %v560 = vunpack.c.l.b16 %v374
        %v561 = vunpack.c.h.b16 %v374
        %v562 = vunpack.c.l.b16 %v375
        %v563 = vunpack.c.h.b16 %v375
        %v564 = vunpack.c.l.b16 %v376
        %v565 = vunpack.c.h.b16 %v376
        %v566 = vunpack.c.l.b16 %v377
        %v567 = vunpack.c.h.b16 %v377
        %v568 = vunpack.c.l.b16 %v378
        %v569 = vunpack.c.h.b16 %v378
        %v570 = vunpack.c.l.b16 %v379
        %v571 = vunpack.c.h.b16 %v379
        %v572 = vunpack.c.l.b16 %v380
        %v573 = vunpack.c.h.b16 %v380
        %v574 = vunpack.c.l.b16 %v381
        %v575 = vunpack.c.h.b16 %v381
        %v576 = vunpack.c.l.b16 %v382
        %v577 = vunpack.c.h.b16 %v382
        %v578 = vunpack.c.l.b16 %v383
        %v579 = vunpack.c.h.b16 %v383
        %v580 = vunpack.c.l.b16 %v384
        %v581 = vunpack.c.h.b16 %v384
        %v582 = vunpack.c.l.b16 %v385
        %v583 = vunpack.c.h.b16 %v385
        %v584 = vunpack.c.l.b16 %v386
        %v585 = vunpack.c.h.b16 %v386
        %v586 = vunpack.c.l.b16 %v387
        %v587 = vunpack.c.h.b16 %v387
        %v588 = vpack.c.b16 %v558, %v556
        %v589 = vpack.c.b16 %v559, %v557
        %v590 = vpack.c.b16 %v562, %v560
        %v591 = vpack.c.b16 %v563, %v561
        %v592 = vpack.c.b16 %v566, %v564
        %v593 = vpack.c.b16 %v567, %v565
        %v594 = vpack.c.b16 %v570, %v568
        %v595 = vpack.c.b16 %v571, %v569
        %v596 = vpack.c.b16 %v574, %v572
        %v597 = vpack.c.b16 %v575, %v573
        %v598 = vpack.c.b16 %v578, %v576
        %v599 = vpack.c.b16 %v579, %v577
        %v600 = vpack.c.b16 %v582, %v580
        %v601 = vpack.c.b16 %v583, %v581
        %v602 = vpack.c.b16 %v586, %v584
        %v603 = vpack.c.b16 %v587, %v585
        %620 = vmatprep.subr.bf16.mxu0 %v589
        %621 = vmatpush1.bf16.msra.mxu0 %v588
        %622 = vmatprep.subr.bf16.mxu0 %v591
        %623 = vmatpush1.bf16.msra.mxu0 %v590
        %624 = vmatprep.subr.bf16.mxu0 %v593
        %625 = vmatpush1.bf16.msra.mxu0 %v592
        %626 = vmatprep.subr.bf16.mxu0 %v595
        %627 = vmatpush1.bf16.msra.mxu0 %v594
        %628 = vmatprep.subr.bf16.mxu0 %v597
        %629 = vmatpush1.bf16.msra.mxu0 %v596
        %630 = vmatprep.subr.bf16.mxu0 %v599
        %631 = vmatpush1.bf16.msra.mxu0 %v598
        %632 = vmatprep.subr.bf16.mxu0 %v601
        %633 = vmatpush1.bf16.msra.mxu0 %v600
        %634 = vmatprep.subr.bf16.mxu0 %v603
        %635 = vmatpush1.bf16.msra.mxu0 %v602
        %636 = vmatprep.subr.bf16.mxu0 0
        %637 = vmatpush1.bf16.msra.mxu0 0
        %638 = vmatprep.subr.bf16.mxu0 0
        %639 = vmatpush1.bf16.msra.mxu0 0
        %640 = vmatprep.subr.bf16.mxu0 0
        %641 = vmatpush1.bf16.msra.mxu0 0
        %642 = vmatprep.subr.bf16.mxu0 0
        %643 = vmatpush1.bf16.msra.mxu0 0
        %644 = vmatprep.subr.bf16.mxu0 0
        %645 = vmatpush1.bf16.msra.mxu0 0
        %646 = vmatprep.subr.bf16.mxu0 0
        %647 = vmatpush1.bf16.msra.mxu0 0
        %648 = vmatprep.subr.bf16.mxu0 0
        %649 = vmatpush1.bf16.msra.mxu0 0
        %650 = vmatprep.subr.bf16.mxu0 0
        %651 = vmatpush1.bf16.msra.mxu0 0
        %652 = vmatprep.mubr.bf16.mxu0 0
        %653 = vmatmul.mubr.bf16.gmra.mrb[0].mxu0 %v371
        %v654 = vpop.f32.mrb[0].mxu0
        %v655 = vadd.f32 %v534, %v654
        %v656 = vpop.f32.mrb[0].mxu0
        %v657 = vadd.f32 %v536, %v656
        %v658 = vpop.f32.mrb[0].mxu0
        %v659 = vpop.f32.mrb[0].mxu0
        %660 = vdwg.mxu0
        %v661 = vld [vmem:[#allocation2] sm:$0xe]
        %s662 = scalar_lea.vmem [#allocation6], 256
        %v663 = vld [vmem:[%s662] sm:$0xff]
        %v664 = vld [vmem:[%s662 + $0x8] sm:$0xff]
        %v665 = vld [vmem:[%s662 + $0x10] sm:$0xff]
        %v666 = vld [vmem:[%s662 + $0x18] sm:$0xff]
        %v667 = vld [vmem:[%s662 + $0x20] sm:$0xff]
        %v668 = vld [vmem:[%s662 + $0x28] sm:$0xff]
        %v669 = vld [vmem:[%s662 + $0x30] sm:$0xff]
        %v670 = vld [vmem:[%s662 + $0x38] sm:$0xff]
        %v671 = vld [vmem:[%s662 + $0x40] sm:$0xff]
        %v672 = vld [vmem:[%s662 + $0x48] sm:$0xff]
        %v673 = vld [vmem:[%s662 + $0x50] sm:$0xff]
        %v674 = vld [vmem:[%s662 + $0x58] sm:$0xff]
        %v675 = vld [vmem:[%s662 + $0x60] sm:$0xff]
        %v676 = vld [vmem:[%s662 + $0x68] sm:$0xff]
        %v677 = vld [vmem:[%s662 + $0x70] sm:$0xff]
        %v678 = vld [vmem:[%s662 + $0x78] sm:$0xff]
        %v680 = vunpack.c.l.b16 %v661
        %v681 = vpack.c.b16 %v409, %v680
        %v682 = vrot.slane %v681, 1
        %v700 = vunpack.c.l.b16 %v663
        %v701 = vunpack.c.h.b16 %v663
        %v702 = vunpack.c.l.b16 %v664
        %v703 = vunpack.c.h.b16 %v664
        %v704 = vunpack.c.l.b16 %v665
        %v705 = vunpack.c.h.b16 %v665
        %v706 = vunpack.c.l.b16 %v666
        %v707 = vunpack.c.h.b16 %v666
        %v708 = vunpack.c.l.b16 %v667
        %v709 = vunpack.c.h.b16 %v667
        %v710 = vunpack.c.l.b16 %v668
        %v711 = vunpack.c.h.b16 %v668
        %v712 = vunpack.c.l.b16 %v669
        %v713 = vunpack.c.h.b16 %v669
        %v714 = vunpack.c.l.b16 %v670
        %v715 = vunpack.c.h.b16 %v670
        %v716 = vunpack.c.l.b16 %v671
        %v717 = vunpack.c.h.b16 %v671
        %v718 = vunpack.c.l.b16 %v672
        %v719 = vunpack.c.h.b16 %v672
        %v720 = vunpack.c.l.b16 %v673
        %v721 = vunpack.c.h.b16 %v673
        %v722 = vunpack.c.l.b16 %v674
        %v723 = vunpack.c.h.b16 %v674
        %v724 = vunpack.c.l.b16 %v675
        %v725 = vunpack.c.h.b16 %v675
        %v726 = vunpack.c.l.b16 %v676
        %v727 = vunpack.c.h.b16 %v676
        %v728 = vunpack.c.l.b16 %v677
        %v729 = vunpack.c.h.b16 %v677
        %v730 = vunpack.c.l.b16 %v678
        %v731 = vunpack.c.h.b16 %v678
        %v732 = vpack.c.b16 %v702, %v700
        %v733 = vpack.c.b16 %v703, %v701
        %v734 = vpack.c.b16 %v706, %v704
        %v735 = vpack.c.b16 %v707, %v705
        %v736 = vpack.c.b16 %v710, %v708
        %v737 = vpack.c.b16 %v711, %v709
        %v738 = vpack.c.b16 %v714, %v712
        %v739 = vpack.c.b16 %v715, %v713
        %v740 = vpack.c.b16 %v718, %v716
        %v741 = vpack.c.b16 %v719, %v717
        %v742 = vpack.c.b16 %v722, %v720
        %v743 = vpack.c.b16 %v723, %v721
        %v744 = vpack.c.b16 %v726, %v724
        %v745 = vpack.c.b16 %v727, %v725
        %v746 = vpack.c.b16 %v730, %v728
        %v747 = vpack.c.b16 %v731, %v729
        %764 = vmatprep.subr.bf16.mxu0 %v733
        %765 = vmatpush1.bf16.msra.mxu0 %v732
        %766 = vmatprep.subr.bf16.mxu0 %v735
        %767 = vmatpush1.bf16.msra.mxu0 %v734
        %768 = vmatprep.subr.bf16.mxu0 %v737
        %769 = vmatpush1.bf16.msra.mxu0 %v736
        %770 = vmatprep.subr.bf16.mxu0 %v739
        %771 = vmatpush1.bf16.msra.mxu0 %v738
        %772 = vmatprep.subr.bf16.mxu0 %v741
        %773 = vmatpush1.bf16.msra.mxu0 %v740
        %774 = vmatprep.subr.bf16.mxu0 %v743
        %775 = vmatpush1.bf16.msra.mxu0 %v742
        %776 = vmatprep.subr.bf16.mxu0 %v745
        %777 = vmatpush1.bf16.msra.mxu0 %v744
        %778 = vmatprep.subr.bf16.mxu0 %v747
        %779 = vmatpush1.bf16.msra.mxu0 %v746
        %780 = vmatprep.subr.bf16.mxu0 0
        %781 = vmatpush1.bf16.msra.mxu0 0
        %782 = vmatprep.subr.bf16.mxu0 0
        %783 = vmatpush1.bf16.msra.mxu0 0
        %784 = vmatprep.subr.bf16.mxu0 0
        %785 = vmatpush1.bf16.msra.mxu0 0
        %786 = vmatprep.subr.bf16.mxu0 0
        %787 = vmatpush1.bf16.msra.mxu0 0
        %788 = vmatprep.subr.bf16.mxu0 0
        %789 = vmatpush1.bf16.msra.mxu0 0
        %790 = vmatprep.subr.bf16.mxu0 0
        %791 = vmatpush1.bf16.msra.mxu0 0
        %792 = vmatprep.subr.bf16.mxu0 0
        %793 = vmatpush1.bf16.msra.mxu0 0
        %794 = vmatprep.subr.bf16.mxu0 0
        %795 = vmatpush1.bf16.msra.mxu0 0
        %796 = vmatprep.mubr.bf16.mxu0 0
        %797 = vmatmul.mubr.bf16.gmra.mrb[0].mxu0 %v682
        %v798 = vpop.f32.mrb[0].mxu0
        %v799 = vadd.f32 0.0, %v798
        %v800 = vpop.f32.mrb[0].mxu0
        %v801 = vadd.f32 0.0, %v800
        %v802 = vpop.f32.mrb[0].mxu0
        %v803 = vpop.f32.mrb[0].mxu0
        %804 = vdwg.mxu0
        %v805 = vadd.f32 %v655, %v799
        %v806 = vadd.f32 %v657, %v801
        %v807 = vld [vmem:[%s2] sm:$0x3]
        %v809 = vlaneseq
        %v810 = vshrl.u32 %v809, 7
        %v811 = vsub.s32 0, %v810
        %v812 = vrot.slane %v807, %v811
        %v813 = vlaneseq
        %v814 = vshrl.u32 %v813, 7
        %v815 = vsub.s32 1, %v814
        %v816 = vrot.slane %v807, %v815
        %v819 = vadd.f32 %v805, %v812
        %v820 = vadd.f32 %v806, %v816
        %v821 = vmax.f32 %v819, 0.0
        %v822 = vmax.f32 %v820, 0.0
        %v823 = vadd.f32 %v821, %v822
        %v824 = vrot.slane %v823, 4
        %v825 = vadd.f32 %v823, %v824
        %v826 = vrot.slane %v825, 2
        %v827 = vadd.f32 %v825, %v826
        %v828 = vrot.slane %v827, 1
        %v829 = vadd.f32 %v827, %v828
        %v830 = vrcp.pop 8.0
        %v831 = vmul.f32 %v829, %v830
        %833 = vrot.lane.b32.xlu0 %v831, 112
        %v834 = vpop.permute.xlu0 %833
        %v836 = vadd.f32 %v831, %v834
        %837 = vrot.lane.b32.xlu0 %v831, 96
        %v838 = vpop.permute.xlu0 %837
        %v840 = vadd.f32 %v836, %v838
        %841 = vrot.lane.b32.xlu0 %v831, 80
        %v842 = vpop.permute.xlu0 %841
        %v844 = vadd.f32 %v840, %v842
        %845 = vrot.lane.b32.xlu0 %v831, 64
        %v846 = vpop.permute.xlu0 %845
        %v848 = vadd.f32 %v844, %v846
        %849 = vrot.lane.b32.xlu0 %v831, 48
        %v850 = vpop.permute.xlu0 %849
        %v852 = vadd.f32 %v848, %v850
        %853 = vrot.lane.b32.xlu0 %v831, 32
        %v854 = vpop.permute.xlu0 %853
        %v856 = vadd.f32 %v852, %v854
        %857 = vrot.lane.b32.xlu0 %v831, 16
        %v858 = vpop.permute.xlu0 %857
        %v860 = vadd.f32 %v856, %v858
        %v861 = vmul.f32 %v860, 0.125
        %v862 = vpack.c.bf16 %v861, %v861
        %v863 = vld [vmem:[#allocation8] sm:$0xf]
        %v864 = vld [vmem:[#allocation8 + $0x4] sm:$0xf]
        %v865 = vld [vmem:[#allocation9] sm:$0x1]
        %v868 = vunpack.c.l.b16 %v863
        %v869 = vunpack.c.l.b16 %v864
        %v870 = vpack.c.b16 %v869, %v868
        %vm872 = vcmask 130048
        %v874 = vsel %vm872, %v862, 0
        %876 = vmatprep.subr.bf16.mxu0 0
        %877 = vmatpush1.bf16.msra.mxu0 %v870
        %878 = vmatprep.subr.bf16.mxu0 0
        %879 = vmatpush1.bf16.msra.mxu0 0
        %880 = vmatprep.subr.bf16.mxu0 0
        %881 = vmatpush1.bf16.msra.mxu0 0
        %882 = vmatprep.subr.bf16.mxu0 0
        %883 = vmatpush1.bf16.msra.mxu0 0
        %884 = vmatprep.subr.bf16.mxu0 0
        %885 = vmatpush1.bf16.msra.mxu0 0
        %886 = vmatprep.subr.bf16.mxu0 0
        %887 = vmatpush1.bf16.msra.mxu0 0
        %888 = vmatprep.subr.bf16.mxu0 0
        %889 = vmatpush1.bf16.msra.mxu0 0
        %890 = vmatprep.subr.bf16.mxu0 0
        %891 = vmatpush1.bf16.msra.mxu0 0
        %892 = vmatprep.subr.bf16.mxu0 0
        %893 = vmatpush1.bf16.msra.mxu0 0
        %894 = vmatprep.subr.bf16.mxu0 0
        %895 = vmatpush1.bf16.msra.mxu0 0
        %896 = vmatprep.subr.bf16.mxu0 0
        %897 = vmatpush1.bf16.msra.mxu0 0
        %898 = vmatprep.subr.bf16.mxu0 0
        %899 = vmatpush1.bf16.msra.mxu0 0
        %900 = vmatprep.subr.bf16.mxu0 0
        %901 = vmatpush1.bf16.msra.mxu0 0
        %902 = vmatprep.subr.bf16.mxu0 0
        %903 = vmatpush1.bf16.msra.mxu0 0
        %904 = vmatprep.subr.bf16.mxu0 0
        %905 = vmatpush1.bf16.msra.mxu0 0
        %906 = vmatprep.subr.bf16.mxu0 0
        %907 = vmatpush1.bf16.msra.mxu0 0
        %908 = vmatprep.mubr.bf16.mxu0 0
        %909 = vmatmul.mubr.bf16.gmra.mrb[0].mxu0 %v874
        %v910 = vpop.f32.mrb[0].mxu0
        %v911 = vadd.f32 %v865, %v910
        %v912 = vpop.f32.mrb[0].mxu0
        %v913 = vpop.f32.mrb[0].mxu0
        %v914 = vpop.f32.mrb[0].mxu0
        %915 = vdwg.mxu0
        %v916 = vmax.f32 %v911, 0.0
        %v917 = vpack.c.bf16 %v916, %v916
        %v918 = vld [vmem:[%s5] sm:$0xf]
        %v919 = vld [vmem:[%s5 + $0x4] sm:$0xf]
        %v920 = vld [vmem:[%s5 + $0x8] sm:$0xf]
        %v921 = vld [vmem:[%s5 + $0xc] sm:$0xf]
        %v922 = vld [vmem:[%s6] sm:$0x1]
        %v927 = vunpack.c.l.b16 %v918
        %v928 = vunpack.c.l.b16 %v919
        %v929 = vunpack.c.l.b16 %v920
        %v930 = vunpack.c.l.b16 %v921
        %v931 = vpack.c.b16 %v928, %v927
        %v932 = vpack.c.b16 %v930, %v929
        %vm935 = vcmask 261120
        %v937 = vsel %vm935, %v917, 0
        %939 = vmatprep.subr.bf16.mxu0 0
        %940 = vmatpush1.bf16.msra.mxu0 %v931
        %941 = vmatprep.subr.bf16.mxu0 0
        %942 = vmatpush1.bf16.msra.mxu0 %v932
        %943 = vmatprep.subr.bf16.mxu0 0
        %944 = vmatpush1.bf16.msra.mxu0 0
        %945 = vmatprep.subr.bf16.mxu0 0
        %946 = vmatpush1.bf16.msra.mxu0 0
        %947 = vmatprep.subr.bf16.mxu0 0
        %948 = vmatpush1.bf16.msra.mxu0 0
        %949 = vmatprep.subr.bf16.mxu0 0
        %950 = vmatpush1.bf16.msra.mxu0 0
        %951 = vmatprep.subr.bf16.mxu0 0
        %952 = vmatpush1.bf16.msra.mxu0 0
        %953 = vmatprep.subr.bf16.mxu0 0
        %954 = vmatpush1.bf16.msra.mxu0 0
        %955 = vmatprep.subr.bf16.mxu0 0
        %956 = vmatpush1.bf16.msra.mxu0 0
        %957 = vmatprep.subr.bf16.mxu0 0
        %958 = vmatpush1.bf16.msra.mxu0 0
        %959 = vmatprep.subr.bf16.mxu0 0
        %960 = vmatpush1.bf16.msra.mxu0 0
        %961 = vmatprep.subr.bf16.mxu0 0
        %962 = vmatpush1.bf16.msra.mxu0 0
        %963 = vmatprep.subr.bf16.mxu0 0
        %964 = vmatpush1.bf16.msra.mxu0 0
        %965 = vmatprep.subr.bf16.mxu0 0
        %966 = vmatpush1.bf16.msra.mxu0 0
        %967 = vmatprep.subr.bf16.mxu0 0
        %968 = vmatpush1.bf16.msra.mxu0 0
        %969 = vmatprep.subr.bf16.mxu0 0
        %970 = vmatpush1.bf16.msra.mxu0 0
        %971 = vmatprep.mubr.bf16.mxu0 0
        %972 = vmatmul.mubr.bf16.gmra.mrb[0].mxu0 %v937
        %v973 = vpop.f32.mrb[0].mxu0
        %v974 = vadd.f32 %v922, %v973
        %v975 = vpop.f32.mrb[0].mxu0
        %v976 = vpop.f32.mrb[0].mxu0
        %v977 = vpop.f32.mrb[0].mxu0
        %978 = vdwg.mxu0
        %980 = vrot.lane.b32.xlu0 %v974, 112
        %v981 = vpop.permute.xlu0 %980
        %v983 = vmax.f32 %v974, %v981
        %v984 = vsub.f32 %v974, %v983
        %v985 = vmul.f32 %v984, 1.442695
        %v986 = vpow.pop %v985
        %988 = vrot.lane.b32.xlu0 %v983, 16
        %v989 = vpop.permute.xlu0 %988
        %v991 = vsub.f32 %v974, %v989
        %v992 = vmul.f32 %v991, 1.442695
        %v993 = vpow.pop %v992
        %995 = vrot.lane.b32.xlu0 %v993, 112
        %v996 = vpop.permute.xlu0 %995
        %v998 = vadd.f32 %v986, %v996
        %v999 = vrcp.pop %v998
        %v1000 = vmul.f32 %v986, %v999
        %1002 = vrot.lane.b32.xlu0 %v999, 16
        %v1003 = vpop.permute.xlu0 %1002
        %v1005 = vmul.f32 %v993, %v1003
        %1007 = vrot.lane.b32.xlu0 %v1000, 16
        %v1008 = vpop.permute.xlu0 %1007
        %1010 = vrot.lane.b32.xlu0 %v1000, 32
        %v1011 = vpop.permute.xlu0 %1010
        %1013 = vrot.lane.b32.xlu0 %v1000, 48
        %v1014 = vpop.permute.xlu0 %1013
        %1016 = vrot.lane.b32.xlu0 %v1000, 64
        %v1017 = vpop.permute.xlu0 %1016
        %1019 = vrot.lane.b32.xlu0 %v1000, 80
        %v1020 = vpop.permute.xlu0 %1019
        %1022 = vrot.lane.b32.xlu0 %v1000, 96
        %v1023 = vpop.permute.xlu0 %1022
        %1025 = vrot.lane.b32.xlu0 %v1000, 112
        %v1026 = vpop.permute.xlu0 %1025
        %v1028 = vsel %vm872, %v1000, %v1008
        %v1029 = vsel %vm935, %v1028, %v1011
        %vm1030 = vcmask 392192
        %v1031 = vsel %vm1030, %v1029, %v1014
        %vm1032 = vcmask 523264
        %v1033 = vsel %vm1032, %v1031, %v1017
        %vm1034 = vcmask 654336
        %v1035 = vsel %vm1034, %v1033, %v1020
        %vm1036 = vcmask 785408
        %v1037 = vsel %vm1036, %v1035, %v1023
        %vm1038 = vcmask 916480
        %v1039 = vsel %vm1038, %v1037, %v1026
        %v1040 = vlaneseq
        %v1041 = vshrl.u32 %v1040, 7
        %v1042 = vsub.s32 0, %v1041
        %v1043 = vrot.slane %v1039, %v1042
        %v1044 = vmul.f32 %v821, %v1043
        %1046 = vrot.lane.b32.xlu0 %v1005, 112
        %v1047 = vpop.permute.xlu0 %1046
        %1049 = vrot.lane.b32.xlu0 %v1005, 16
        %v1050 = vpop.permute.xlu0 %1049
        %1052 = vrot.lane.b32.xlu0 %v1005, 32
        %v1053 = vpop.permute.xlu0 %1052
        %1055 = vrot.lane.b32.xlu0 %v1005, 48
        %v1056 = vpop.permute.xlu0 %1055
        %1058 = vrot.lane.b32.xlu0 %v1005, 64
        %v1059 = vpop.permute.xlu0 %1058
        %1061 = vrot.lane.b32.xlu0 %v1005, 80
        %v1062 = vpop.permute.xlu0 %1061
        %1064 = vrot.lane.b32.xlu0 %v1005, 96
        %v1065 = vpop.permute.xlu0 %1064
        %v1067 = vsel %vm872, %v1047, %v1005
        %v1068 = vsel %vm935, %v1067, %v1050
        %v1069 = vsel %vm1030, %v1068, %v1053
        %v1070 = vsel %vm1032, %v1069, %v1056
        %v1071 = vsel %vm1034, %v1070, %v1059
        %v1072 = vsel %vm1036, %v1071, %v1062
        %v1073 = vsel %vm1038, %v1072, %v1065
        %v1074 = vlaneseq
        %v1075 = vshrl.u32 %v1074, 7
        %v1076 = vsub.s32 0, %v1075
        %v1077 = vrot.slane %v1073, %v1076
        %v1078 = vmul.f32 %v822, %v1077
        %v1079 = vadd.f32 %v1044, %v1078
        %1080 = vst [vmem:[%s335] sm:$0xff] %v1079
        %s1081 = sand.u32 %s186, 1
        %s1082 = scalar_lea.sflag [#allocation5], %s1081
        %s1083 = sand.u32 %s186, 1
        %s1084 = smul.addr %s1083, 8
        %s1085 = scalar_lea.vmem [#allocation11], %s1084
        // Predicated region
        $region65: #{tpu_custom_call.1} parent=47 // pred_check
          %p1086 = pneg %p196
        $region66: #{tpu_custom_call.1} parent=47 // pred_check_branch
          %1088 = sbr.rel (%p1086) target = $region68
        $region67: #{tpu_custom_call.1} parent=47 // pred_region
          %s1090 = ssub.s32 128, 128
          %1091 = vsyncadd %s1082, %s1090
          %s1092 = smul.addr %s26, 128
          %s1093 = scalar_lea.hbm %s7, %s1092
          %s1095 = sshll.u32 %s1085, 4
          %s1096 = int_to_ptr.vmem [resolvable:$true] %s1095
          %1098 = dma.vmem_to_hbm [thread:$0]  %s1096, 128, %s1093, %s1082
        $region68: #{tpu_custom_call.1} parent=47 // pred_fallthru
          _
      $region48: #{tpu_custom_call.1} parent=5 // pred_fallthru
        _
      %p1099 = scmp.le.s32.totalorder 2, %s21
      // Predicated region
      $region69: #{tpu_custom_call.1} parent=5 // pred_check
        %p1100 = pneg %p1099
      $region70: #{tpu_custom_call.1} parent=5 // pred_check_branch
        %1102 = sbr.rel (%p1100) target = $region72
      $region71: #{tpu_custom_call.1} parent=5 // pred_region
        %s1103 = ssub.s32 %s21, 2
        // Predicated region
        $region73: #{tpu_custom_call.1} parent=71 // pred_check
          %p1104 = pneg %p202
        $region74: #{tpu_custom_call.1} parent=71 // pred_check_branch
          %1106 = sbr.rel (%p1104) target = $region76
        $region75: #{tpu_custom_call.1} parent=71 // pred_region
          %s1107 = sand.u32 %s187, 1
          %s1108 = scalar_lea.sflag [#allocation5], %s1107
          %s1109 = sand.u32 %s187, 1
          %s1110 = smul.addr %s1109, 8
          %s1111 = scalar_lea.vmem [#allocation11], %s1110
          %1112 = dma.done %s1108, 128
        $region76: #{tpu_custom_call.1} parent=71 // pred_fallthru
          _
      $region72: #{tpu_custom_call.1} parent=5 // pred_fallthru
        _
    $region6: #{tpu_custom_call.1} parent=1 // loop_footer
      %s25 = sadd.s32 1, %s21
    $region7: #{tpu_custom_call.1} parent=1 // loop_footer_branch
      %20 = sbr.rel target = $region3
    $region8: #{tpu_custom_call.1} parent=1 // loop_exit
      _
    %1113 = vsyncpa [#allocation4], 1
    %s1114 = scalar_lea.sflag [#allocation4], 1
    %1115 = vsyncpa %s1114, 1
    %1116 = vsyncpa [#allocation7], 1
    %1117 = vsyncpa [#allocation10], 1
    %1118 = vsyncpa [#allocation5], 1
    %s1119 = scalar_lea.sflag [#allocation5], 1
    %1120 = vsyncpa %s1119, 1

</llo_original>
